<compile_context>
chip_gen: v6e
topology: v6e:2x2x1
jax: 0.10.0
libtpu: 0.0.40
codegen_flags: <defaults>
</compile_context>

<pallas_src>
import jax
import jax.numpy as jnp
from jax.experimental import pallas as pl
from jax.experimental.pallas import tpu as pltpu


def _round_up(a, b):
    return ((a + b - 1) // b) * b


def _seq_label_kernel(x_ref, w1_ref, b1_ref, wso_ref, bso_ref, out_ref, acc_ref):
    # Grid: (row tiles [parallel], K tiles over hidden [arbitrary]).
    # x_ref:   (tm, tk)     input rows in their original dtype (cast in-kernel)
    # w1_ref:  (tk, h2)     bf16 slice of the first linear weight
    # b1_ref:  (1, h2)      f32
    # wso_ref: (h2, OUTP)   bf16 fused sub|obj head weight (lane-padded to 128k)
    # bso_ref: (1, OUTP)    f32
    # out_ref: (tm, OUTP)   fused lane-dense output block (bf16 store)
    # acc_ref: (tm, h2)     f32 accumulator for the K-tiled first matmul
    k = pl.program_id(1)

    @pl.when(k == 0)
    def _():
        acc_ref[...] = jnp.zeros_like(acc_ref)

    xb = x_ref[...].astype(w1_ref.dtype)          # f32 -> bf16 on the VPU (free here)
    acc_ref[...] += jnp.dot(xb, w1_ref[...], preferred_element_type=jnp.float32)

    @pl.when(k == pl.num_programs(1) - 1)
    def _():
        # Linear -> ReLU  (dropout == identity in eval mode)
        h = jnp.maximum(acc_ref[...] + b1_ref[...], 0.0).astype(wso_ref.dtype)
        # Fused sub/obj heads: one MXU matmul, one lane-dense store.
        out = jnp.dot(h, wso_ref[...], preferred_element_type=jnp.float32) + bso_ref[...]
        out_ref[...] = out.astype(out_ref.dtype)


def _vmem_bytes(tm, tk, h2, out_pad, num_k, x_bytes, w_bytes, out_bytes):
    """VMEM footprint estimate, including in-kernel intermediates."""
    nbuf_w1 = 1 if num_k == 1 else 2          # constant-index block -> single buffer
    per_tile = (2 * tm * tk * x_bytes         # x block, double-buffered
                + nbuf_w1 * tk * h2 * w_bytes  # w1 block(s)
                + 2 * tm * out_pad * out_bytes  # out block, double-buffered
                + tm * h2 * 4                  # f32 accumulator scratch
                + tm * h2 * w_bytes            # bf16 copy of h
                + tm * out_pad * 4)            # f32 out before the store cast
    resident = (h2 * out_pad * w_bytes         # fused head weight (single buffer)
                + (h2 + out_pad) * 4)          # biases (single buffer)
    return per_tile + resident


def sequence_label_for_so(x, params, *, tm=None, mxu_dtype=jnp.bfloat16,
                          store_dtype=jnp.bfloat16):
    """x: (bs, seq_len, hidden) -> (sub, obj), each (bs, seq_len, tag_size)."""
    bs, seq_len, hidden = x.shape
    w1, b1 = params["w1"], params["b1"]
    w2, b2 = params["w2"], params["b2"]
    w3, b3 = params["w3"], params["b3"]
    h2 = w1.shape[1]
    tag = w2.shape[1]

    # ---- fuse the two heads; pad the output lane axis to a multiple of 128 ----
    out_w = 2 * tag
    out_pad = _round_up(out_w, 128)
    w_so = jnp.concatenate([w2, w3], axis=1)           # (h2, 2*tag)
    b_so = jnp.concatenate([b2, b3], axis=0)           # (2*tag,)
    if out_pad != out_w:
        w_so = jnp.pad(w_so, ((0, 0), (0, out_pad - out_w)))
        b_so = jnp.pad(b_so, ((0, out_pad - out_w),))

    # ---- generation-aware VMEM budget ----
    try:
        vmem_cap = int(pltpu.get_tpu_info().vmem_capacity_bytes)
    except Exception:  # pragma: no cover - conservative fallback (v7x per-TC)
        vmem_cap = 64 << 20
    vmem_budget = (vmem_cap * 5) // 8            # ~40 MiB on 64 MiB, ~80 MiB on 128 MiB

    # ---- tile selection: tall MXU row tiles, K-tiling when weights dominate ----
    n_tok = bs * seq_len
    row_align = 256                              # MXU-native row height (v6e/v7x)
    if tm is None:
        tm = 1024 if vmem_cap >= (96 << 20) else 512
    if n_tok < row_align:
        tm = _round_up(n_tok, 8)                 # tiny input: one (partial) pass
    else:
        tm = max(row_align, _round_up(min(tm, n_tok), row_align))
        if n_tok >= 2 * row_align:               # keep >=2 row tiles for v7x's 2 TCs
            tm = min(tm, _round_up(pl.cdiv(n_tok, 2), row_align))

    x_bytes = x.dtype.itemsize
    w_bytes = jnp.dtype(mxu_dtype).itemsize
    out_bytes = jnp.dtype(store_dtype).itemsize

    tk = hidden

    def est(tm_, tk_):
        return _vmem_bytes(tm_, tk_, h2, out_pad, hidden // tk_,
                           x_bytes, w_bytes, out_bytes)

    # Weights (tm-independent) too big?  Tile the hidden/K axis and keep tm tall.
    while est(tm, tk) > vmem_budget and tk % 2 == 0 and (tk // 2) % 128 == 0:
        tk //= 2
    # Still over budget?  Shrink the row tile, but never below one MXU pass.
    while est(tm, tk) > vmem_budget and tm > row_align:
        tm = max(row_align, _round_up(tm // 2, row_align))
    num_k = hidden // tk

    grid = (pl.cdiv(n_tok, tm), num_k)

    # ---- operand prep: x untouched (cast happens in-kernel), bf16 weights ----
    x2d = x.reshape(n_tok, hidden)               # metadata only, no copy / no cast
    w1c = w1.astype(mxu_dtype)
    wsoc = w_so.astype(mxu_dtype)
    b1r = b1.reshape(1, h2).astype(jnp.float32)
    bsor = b_so.reshape(1, out_pad).astype(jnp.float32)

    resident_kw = dict(pipeline_mode=pl.Buffered(1))   # constant blocks: 1 buffer
    w1_kw = resident_kw if num_k == 1 else {}

    flops = 2 * n_tok * (hidden * h2 + h2 * out_pad)
    bytes_accessed = (n_tok * hidden * x_bytes + n_tok * out_pad * out_bytes
                      + hidden * h2 * w_bytes + h2 * out_pad * w_bytes
                      + (h2 + out_pad) * 4)

    cp_kwargs = dict(dimension_semantics=("parallel", "arbitrary"))
    need = est(tm, tk)
    if need > (16 << 20):                        # above the smallest scoped default
        cp_kwargs["vmem_limit_bytes"] = int(min((vmem_cap * 7) // 8,
                                                max(need + (8 << 20), 32 << 20)))

    out = pl.pallas_call(
        _seq_label_kernel,
        out_shape=jax.ShapeDtypeStruct((n_tok, out_pad), store_dtype),
        grid_spec=pltpu.PrefetchScalarGridSpec(
            num_scalar_prefetch=0,
            grid=grid,
            in_specs=[
                pl.BlockSpec((tm, tk), lambda i, k: (i, k)),               # x rows
                pl.BlockSpec((tk, h2), lambda i, k: (k, 0), **w1_kw),      # w1 slice
                pl.BlockSpec((1, h2), lambda i, k: (0, 0), **resident_kw),  # b1
                pl.BlockSpec((h2, out_pad), lambda i, k: (0, 0), **resident_kw),  # W_so
                pl.BlockSpec((1, out_pad), lambda i, k: (0, 0), **resident_kw),   # b_so
            ],
            out_specs=pl.BlockSpec((tm, out_pad), lambda i, k: (i, 0)),
            scratch_shapes=[pltpu.VMEM((tm, h2), jnp.float32)],
        ),
        compiler_params=pltpu.CompilerParams(**cp_kwargs),
        cost_estimate=pl.CostEstimate(flops=flops, transcendentals=0,
                                      bytes_accessed=bytes_accessed),
    )(x2d, w1c, b1r, wsoc, bsor)

    # Single slice of the useful lanes; split sub/obj on the narrow result.
    fused = out[:, :out_w].astype(x.dtype).reshape(bs, seq_len, out_w)
    return fused[..., :tag], fused[..., tag:]


def init_params(key, hidden, tag_size, dtype=jnp.float32):
    """Deterministic synthetic parameters matching the PyTorch module shapes
    (stored as (in, out) instead of PyTorch's (out, in))."""
    h2 = hidden // 2
    ks = jax.random.split(key, 6)
    scale1 = 1.0 / jnp.sqrt(hidden)
    scale2 = 1.0 / jnp.sqrt(h2)
    return {
        "w1": jax.random.uniform(ks[0], (hidden, h2), dtype, -scale1, scale1),
        "b1": jax.random.uniform(ks[1], (h2,), dtype, -scale1, scale1),
        "w2": jax.random.uniform(ks[2], (h2, tag_size), dtype, -scale2, scale2),
        "b2": jax.random.uniform(ks[3], (tag_size,), dtype, -scale2, scale2),
        "w3": jax.random.uniform(ks[4], (h2, tag_size), dtype, -scale2, scale2),
        "b3": jax.random.uniform(ks[5], (tag_size,), dtype, -scale2, scale2),
    }


def reference(x, p, mxu_dtype=jnp.bfloat16, store_dtype=jnp.bfloat16):
    """Pure-JAX reference using the same bf16-operand / f32-accumulate /
    bf16-store math as the kernel."""
    xb = x.astype(mxu_dtype)
    h = jnp.dot(xb, p["w1"].astype(mxu_dtype),
                preferred_element_type=jnp.float32) + p["b1"].astype(jnp.float32)
    h = jnp.maximum(h, 0.0).astype(mxu_dtype)
    sub = jnp.dot(h, p["w2"].astype(mxu_dtype),
                  preferred_element_type=jnp.float32) + p["b2"].astype(jnp.float32)
    obj = jnp.dot(h, p["w3"].astype(mxu_dtype),
                  preferred_element_type=jnp.float32) + p["b3"].astype(jnp.float32)
    return (sub.astype(store_dtype).astype(x.dtype),
            obj.astype(store_dtype).astype(x.dtype))


if __name__ == "__main__":
    # Small case matching the module defaults.
    bs, seq_len, hidden, tag_size = 2, 8, 32, 8
    key = jax.random.PRNGKey(0)
    kx, kp = jax.random.split(key)
    x = jax.random.normal(kx, (bs, seq_len, hidden), dtype=jnp.float32)
    params = init_params(kp, hidden, tag_size)

    sub, obj = sequence_label_for_so(x, params)
    jax.block_until_ready((sub, obj))
    sub_ref, obj_ref = reference(x, params)
    assert sub.shape == (bs, seq_len, tag_size)
    assert obj.shape == (bs, seq_len, tag_size)
    assert jnp.allclose(sub, sub_ref, atol=2e-2, rtol=2e-2)
    assert jnp.allclose(obj, obj_ref, atol=2e-2, rtol=2e-2)

    # Ragged token count, multiple row tiles, lane-padded heads (no wrapper pad
    # of x: the partial tail block is handled by the cdiv grid).
    bs2, seq2, hid2, tag2 = 2, 300, 256, 10
    kx2, kp2 = jax.random.split(jax.random.PRNGKey(1))
    x2 = jax.random.normal(kx2, (bs2, seq2, hid2), dtype=jnp.float32)
    params2 = init_params(kp2, hid2, tag2)
    sub2, obj2 = sequence_label_for_so(x2, params2)
    jax.block_until_ready((sub2, obj2))
    sub2_ref, obj2_ref = reference(x2, params2)
    assert sub2.shape == (bs2, seq2, tag2)
    assert jnp.allclose(sub2, sub2_ref, atol=2e-2, rtol=2e-2)
    assert jnp.allclose(obj2, obj2_ref, atol=2e-2, rtol=2e-2)

    print("KERNEL_OK")
</pallas_src>

<mosaic_0001>
module attributes {stable_mosaic.version = 11 : i64} {
  func.func @_seq_label_kernel(%arg0: i32, %arg1: i32, %arg2: memref<16x32xf32, #tpu.memory_space<vmem>>, %arg3: memref<32x16xbf16, #tpu.memory_space<vmem>>, %arg4: memref<1x16xf32, #tpu.memory_space<vmem>>, %arg5: memref<16x128xbf16, #tpu.memory_space<vmem>>, %arg6: memref<1x128xf32, #tpu.memory_space<vmem>>, %arg7: memref<16x128xbf16, #tpu.memory_space<vmem>>, %arg8: memref<16x16xf32, #tpu.memory_space<vmem>>) attributes {dimension_semantics = [#tpu.dimension_semantics<parallel>, #tpu.dimension_semantics<arbitrary>], iteration_bounds = array<i64: 1, 1>, scalar_prefetch = 0 : i64, scratch_operands = 1 : i64, tpu.core_type = #tpu.core_type<tc>, window_params = [{transform_indices = @transform_0, window_bounds = array<i64: 16, 32>}, {pipeline_mode = #tpu.pipeline_mode<synchronous>, transform_indices = @transform_1, window_bounds = array<i64: 32, 16>}, {pipeline_mode = #tpu.pipeline_mode<synchronous>, transform_indices = @transform_2, window_bounds = array<i64: 1, 16>}, {pipeline_mode = #tpu.pipeline_mode<synchronous>, transform_indices = @transform_3, window_bounds = array<i64: 16, 128>}, {pipeline_mode = #tpu.pipeline_mode<synchronous>, transform_indices = @transform_4, window_bounds = array<i64: 1, 128>}, {transform_indices = @transform_5, window_bounds = array<i64: 16, 128>}]} {
    %c0_i32 = arith.constant 0 : i32
    %0 = arith.cmpi eq, %arg1, %c0_i32 : i32
    %1 = arith.extui %0 : i1 to i32
    %c0_i32_0 = arith.constant 0 : i32
    %2 = arith.cmpi ne, %1, %c0_i32_0 : i32
    scf.if %2 {
      %cst_10 = arith.constant 0.000000e+00 : f32
      %13 = vector.broadcast %cst_10 : f32 to vector<16x16xf32>
      %c0_11 = arith.constant 0 : index
      %c0_12 = arith.constant 0 : index
      %14 = vector.load %arg8[%c0_11, %c0_12] : memref<16x16xf32, #tpu.memory_space<vmem>>, vector<16x16xf32>
      tpu.vector_store %arg8[%c0_11, %c0_12], %13 {strides = array<i32>} : memref<16x16xf32, #tpu.memory_space<vmem>>, vector<16x16xf32>,
    } else {
    }
    %c0 = arith.constant 0 : index
    %c0_1 = arith.constant 0 : index
    %3 = vector.load %arg2[%c0, %c0_1] : memref<16x32xf32, #tpu.memory_space<vmem>>, vector<16x32xf32>
    %4 = arith.truncf %3 : vector<16x32xf32> to vector<16x32xbf16>
    %c0_2 = arith.constant 0 : index
    %c0_3 = arith.constant 0 : index
    %5 = vector.load %arg8[%c0_2, %c0_3] : memref<16x16xf32, #tpu.memory_space<vmem>>, vector<16x16xf32>
    %c0_4 = arith.constant 0 : index
    %c0_5 = arith.constant 0 : index
    %6 = vector.load %arg3[%c0_4, %c0_5] : memref<32x16xbf16, #tpu.memory_space<vmem>>, vector<32x16xbf16>
    %cst = arith.constant dense<0.000000e+00> : vector<16x16xf32>
    %7 = tpu.matmul %4, %6, %cst {dimension_numbers = #tpu.dot_dimension_numbers<[1], [0], [0], [1], [0, 0, 1, 1], [], []>} : vector<16x32xbf16>, vector<32x16xbf16>, vector<16x16xf32> -> vector<16x16xf32>
    %8 = arith.addf %5, %7 : vector<16x16xf32>
    %c0_6 = arith.constant 0 : index
    %c0_7 = arith.constant 0 : index
    %9 = vector.load %arg8[%c0_6, %c0_7] : memref<16x16xf32, #tpu.memory_space<vmem>>, vector<16x16xf32>
    tpu.vector_store %arg8[%c0_6, %c0_7], %8 {strides = array<i32>} : memref<16x16xf32, #tpu.memory_space<vmem>>, vector<16x16xf32>,
    %c0_i32_8 = arith.constant 0 : i32
    %10 = arith.cmpi eq, %arg1, %c0_i32_8 : i32
    %11 = arith.extui %10 : i1 to i32
    %c0_i32_9 = arith.constant 0 : i32
    %12 = arith.cmpi ne, %11, %c0_i32_9 : i32
    scf.if %12 {
      %c0_10 = arith.constant 0 : index
      %c0_11 = arith.constant 0 : index
      %13 = vector.load %arg8[%c0_10, %c0_11] : memref<16x16xf32, #tpu.memory_space<vmem>>, vector<16x16xf32>
      %c0_12 = arith.constant 0 : index
      %c0_13 = arith.constant 0 : index
      %14 = vector.load %arg4[%c0_12, %c0_13] : memref<1x16xf32, #tpu.memory_space<vmem>>, vector<1x16xf32>
      %15 = vector.broadcast %14 : vector<1x16xf32> to vector<16x16xf32>
      %16 = arith.addf %13, %15 : vector<16x16xf32>
      %cst_14 = arith.constant 0.000000e+00 : f32
      %17 = vector.broadcast %cst_14 : f32 to vector<16x16xf32>
      %18 = arith.maximumf %16, %17 : vector<16x16xf32>
      %19 = arith.truncf %18 : vector<16x16xf32> to vector<16x16xbf16>
      %c0_15 = arith.constant 0 : index
      %c0_16 = arith.constant 0 : index
      %20 = vector.load %arg5[%c0_15, %c0_16] : memref<16x128xbf16, #tpu.memory_space<vmem>>, vector<16x128xbf16>
      %cst_17 = arith.constant dense<0.000000e+00> : vector<16x128xf32>
      %21 = tpu.matmul %19, %20, %cst_17 {dimension_numbers = #tpu.dot_dimension_numbers<[1], [0], [0], [1], [0, 0, 1, 1], [], []>} : vector<16x16xbf16>, vector<16x128xbf16>, vector<16x128xf32> -> vector<16x128xf32>
      %c0_18 = arith.constant 0 : index
      %c0_19 = arith.constant 0 : index
      %22 = vector.load %arg6[%c0_18, %c0_19] : memref<1x128xf32, #tpu.memory_space<vmem>>, vector<1x128xf32>
      %23 = vector.broadcast %22 : vector<1x128xf32> to vector<16x128xf32>
      %24 = arith.addf %21, %23 : vector<16x128xf32>
      %25 = arith.truncf %24 : vector<16x128xf32> to vector<16x128xbf16>
      %c0_20 = arith.constant 0 : index
      %c0_21 = arith.constant 0 : index
      %26 = vector.load %arg7[%c0_20, %c0_21] : memref<16x128xbf16, #tpu.memory_space<vmem>>, vector<16x128xbf16>
      tpu.vector_store %arg7[%c0_20, %c0_21], %25 {strides = array<i32>} : memref<16x128xbf16, #tpu.memory_space<vmem>>, vector<16x128xbf16>,
    } else {
    }
    return
  }
  func.func @transform_0(%arg0: i32, %arg1: i32) -> (i32, i32) {
    %c0_i32 = arith.constant 0 : i32
    return %arg0, %arg1 : i32, i32
  }
  func.func @transform_1(%arg0: i32, %arg1: i32) -> (i32, i32) {
    %c0_i32 = arith.constant 0 : i32
    %c0_i32_0 = arith.constant 0 : i32
    return %arg1, %c0_i32 : i32, i32
  }
  func.func @transform_2(%arg0: i32, %arg1: i32) -> (i32, i32) {
    %c0_i32 = arith.constant 0 : i32
    %c0_i32_0 = arith.constant 0 : i32
    %c0_i32_1 = arith.constant 0 : i32
    return %c0_i32, %c0_i32_0 : i32, i32
  }
  func.func @transform_3(%arg0: i32, %arg1: i32) -> (i32, i32) {
    %c0_i32 = arith.constant 0 : i32
    %c0_i32_0 = arith.constant 0 : i32
    %c0_i32_1 = arith.constant 0 : i32
    return %c0_i32, %c0_i32_0 : i32, i32
  }
  func.func @transform_4(%arg0: i32, %arg1: i32) -> (i32, i32) {
    %c0_i32 = arith.constant 0 : i32
    %c0_i32_0 = arith.constant 0 : i32
    %c0_i32_1 = arith.constant 0 : i32
    return %c0_i32, %c0_i32_0 : i32, i32
  }
  func.func @transform_5(%arg0: i32, %arg1: i32) -> (i32, i32) {
    %c0_i32 = arith.constant 0 : i32
    %c0_i32_0 = arith.constant 0 : i32
    return %arg0, %c0_i32 : i32, i32
  }
}

</mosaic_0001>

<llo_original>
// kernel: tpu_custom_call.1
$region0: #{tpu_custom_call.1}
  #allocation0 [shape = 'u32[]', space=smem, size = 0x4, offset = 0x4, fixed_abs, tag = 'smem constant byte address 0x4 - core index']
  #allocation1 [shape = 'u32[144,128]{1,0:T(1,128)}', space=vmem, size = 0x12000, scoped, tag = 'internal scratch']
  #allocation2 [shape = 'f32[16,16]{1,0:T(8,128)}', space=vmem, size = 0x2000, scoped, tag = 'scratch operand']
  %s0 = inlined_call_operand.vmem [shape: f32[16,32], index: 0, kind: input, shape index: {}]
  %s1 = inlined_call_operand.vmem [shape: bf16[32,16], index: 1, kind: input, shape index: {}]
  %s2 = inlined_call_operand.vmem [shape: f32[1,16], index: 2, kind: input, shape index: {}]
  %s3 = inlined_call_operand.vmem [shape: bf16[16,128], index: 3, kind: input, shape index: {}]
  %s4 = inlined_call_operand.vmem [shape: f32[1,128], index: 4, kind: input, shape index: {}]
  %s5 = inlined_call_operand.hbm [shape: bf16[16,128], index: 5, kind: output, shape index: {}]
  %s6 = sld [smem:[#allocation0]]
  $region38: #{tpu_custom_call.1} parent=0
    _
  %s8 = ssub.s32 1, %s6
  %s9 = scalar_select 0, %s8, %s6
  $region1: #{tpu_custom_call.1} parent=0
    #allocation3 [shape = 'u8[4096]{0}', space=vmem, size = 0x1000, scoped, tag = 'output window, operand 0, single buffered']
    #allocation4 [shape = 's32[1]{0}', space=sflag, size = 0x4, scoped, tag = 'scoped memory for tpu_custom_call.1']
    %10 = vsyncpa [#allocation4], 0
    // Predicated region
    $region2: #{tpu_custom_call.1} parent=1 // pred_check
      _
    $region3: #{tpu_custom_call.1} parent=1 // pred_check_branch
      %12 = sbr.rel (0) target = $region5
    $region4: #{tpu_custom_call.1} parent=1 // pred_region
      _
    $region5: #{tpu_custom_call.1} parent=1 // pred_fallthru
      _
    // Predicated region
    $region6: #{tpu_custom_call.1} parent=1 // pred_check
      _
    $region7: #{tpu_custom_call.1} parent=1 // pred_check_branch
      %14 = sbr.rel (0) target = $region9
    $region8: #{tpu_custom_call.1} parent=1 // pred_region
      _
    $region9: #{tpu_custom_call.1} parent=1 // pred_fallthru
      _
    // Predicated region
    $region10: #{tpu_custom_call.1} parent=1 // pred_check
      _
    $region11: #{tpu_custom_call.1} parent=1 // pred_check_branch
      %16 = sbr.rel (0) target = $region13
    $region12: #{tpu_custom_call.1} parent=1 // pred_region
      _
    $region13: #{tpu_custom_call.1} parent=1 // pred_fallthru
      _
    // Predicated region
    $region14: #{tpu_custom_call.1} parent=1 // pred_check
      _
    $region15: #{tpu_custom_call.1} parent=1 // pred_check_branch
      %18 = sbr.rel (0) target = $region17
    $region16: #{tpu_custom_call.1} parent=1 // pred_region
      _
    $region17: #{tpu_custom_call.1} parent=1 // pred_fallthru
      _
    // Predicated region
    $region18: #{tpu_custom_call.1} parent=1 // pred_check
      _
    $region19: #{tpu_custom_call.1} parent=1 // pred_check_branch
      %20 = sbr.rel (0) target = $region21
    $region20: #{tpu_custom_call.1} parent=1 // pred_region
      _
    $region21: #{tpu_custom_call.1} parent=1 // pred_fallthru
      _
    %p22 = scmp.eq.s32.totalorder 0, 0
    // Predicated region
    $region22: #{tpu_custom_call.1} parent=1 // pred_check
      %p23 = pneg %p22
    $region23: #{tpu_custom_call.1} parent=1 // pred_check_branch
      %25 = sbr.rel (%p23) target = $region25
    $region24: #{tpu_custom_call.1} parent=1 // pred_region
      %vm26 = vcmask 130048
      %27 = vst.msk [vmem:[#allocation2] sm:$0xff] %vm26, 0.0
      %28 = vst.msk [vmem:[#allocation2 + $0x8] sm:$0xff] %vm26, 0.0
    $region25: #{tpu_custom_call.1} parent=1 // pred_fallthru
      _
    %v29 = vld [vmem:[%s0] sm:$0xff]
    %v30 = vld [vmem:[%s0 + $0x8] sm:$0xff]
    %v31 = vpack.c.bf16 %v30, %v29
    %v32 = vld [vmem:[#allocation2] sm:$0xff]
    %v33 = vld [vmem:[#allocation2 + $0x8] sm:$0xff]
    %v34 = vld [vmem:[%s1] sm:$0xf]
    %v35 = vld [vmem:[%s1 + $0x4] sm:$0xf]
    %v36 = vld [vmem:[%s1 + $0x8] sm:$0xf]
    %v37 = vld [vmem:[%s1 + $0xc] sm:$0xf]
    %v42 = vunpack.c.l.b16 %v34
    %v43 = vunpack.c.l.b16 %v35
    %v44 = vunpack.c.l.b16 %v36
    %v45 = vunpack.c.l.b16 %v37
    %v46 = vpack.c.b16 %v43, %v42
    %v47 = vpack.c.b16 %v45, %v44
    %vm50 = vcmask 261120
    %v52 = vsel %vm50, %v31, 0
    %54 = vmatprep.subr.bf16.mxu0 0
    %55 = vmatpush1.bf16.msra.mxu0 0
    %56 = vmatprep.subr.bf16.mxu0 0
    %57 = vmatpush1.bf16.msra.mxu0 0
    %58 = vmatprep.subr.bf16.mxu0 0
    %59 = vmatpush1.bf16.msra.mxu0 0
    %60 = vmatprep.subr.bf16.mxu0 0
    %61 = vmatpush1.bf16.msra.mxu0 0
    %62 = vmatprep.subr.bf16.mxu0 0
    %63 = vmatpush1.bf16.msra.mxu0 0
    %64 = vmatprep.subr.bf16.mxu0 0
    %65 = vmatpush1.bf16.msra.mxu0 0
    %66 = vmatprep.subr.bf16.mxu0 0
    %67 = vmatpush1.bf16.msra.mxu0 %v47
    %68 = vmatprep.subr.bf16.mxu0 0
    %69 = vmatpush1.bf16.msra.mxu0 %v46
    %70 = vmatprep.subr.bf16.mxu0 0
    %71 = vmatpush2.bf16.msra.mxu0 0
    %72 = vmatprep.subr.bf16.mxu0 0
    %73 = vmatpush2.bf16.msra.mxu0 0
    %74 = vmatprep.subr.bf16.mxu0 0
    %75 = vmatpush2.bf16.msra.mxu0 0
    %76 = vmatprep.subr.bf16.mxu0 0
    %77 = vmatpush2.bf16.msra.mxu0 0
    %78 = vmatprep.subr.bf16.mxu0 0
    %79 = vmatpush2.bf16.msra.mxu0 0
    %80 = vmatprep.subr.bf16.mxu0 0
    %81 = vmatpush2.bf16.msra.mxu0 0
    %82 = vmatprep.subr.bf16.mxu0 0
    %83 = vmatpush2.bf16.msra.mxu0 0
    %84 = vmatprep.subr.bf16.mxu0 0
    %85 = vmatpush2.bf16.msra.mxu0 0
    %86 = vmatprep.mubr.bf16.mxu0 0
    %87 = vmatmul.mubr.bf16.gmra.mxu0 %v52
    %v88 = vpop.f32.mrf.mxu0
    %v89 = vadd.f32 0.0, %v88
    %v90 = vpop.f32.mrf.mxu0
    %v91 = vpop.f32.mrf.mxu0
    %v92 = vadd.f32 0.0, %v91
    %v93 = vpop.f32.mrf.mxu0
    %94 = vdwg.mxu0
    %v95 = vadd.f32 %v32, %v89
    %v96 = vadd.f32 %v33, %v92
    %vm97 = vcmask 130048
    %98 = vst.msk [vmem:[#allocation2] sm:$0xff] %vm97, %v95
    %99 = vst.msk [vmem:[#allocation2 + $0x8] sm:$0xff] %vm97, %v96
    // Predicated region
    $region26: #{tpu_custom_call.1} parent=1 // pred_check
      %p100 = pneg %p22
    $region27: #{tpu_custom_call.1} parent=1 // pred_check_branch
      %102 = sbr.rel (%p100) target = $region29
    $region28: #{tpu_custom_call.1} parent=1 // pred_region
      %v103 = vld [vmem:[#allocation2] sm:$0xff]
      %v104 = vld [vmem:[#allocation2 + $0x8] sm:$0xff]
      %v105 = vld [vmem:[%s2] sm:$0x1]
      %v107 = vlaneseq
      %v108 = vshrl.u32 %v107, 7
      %v109 = vsub.s32 0, %v108
      %v110 = vrot.slane %v105, %v109
      %v112 = vadd.f32 %v103, %v110
      %v113 = vadd.f32 %v104, %v110
      %v114 = vmax.f32 %v112, 0.0
      %v115 = vmax.f32 %v113, 0.0
      %v116 = vpack.c.bf16 %v115, %v114
      %v117 = vld [vmem:[%s3] sm:$0xf]
      %v118 = vld [vmem:[%s3 + $0x4] sm:$0xf]
      %v119 = vld [vmem:[%s4] sm:$0x1]
      %v121 = vlaneseq
      %v122 = vshrl.u32 %v121, 7
      %v123 = vsub.s32 0, %v122
      %v124 = vrot.slane %v119, %v123
      %v128 = vunpack.c.l.b16 %v117
      %v129 = vunpack.c.l.b16 %v118
      %v130 = vpack.c.b16 %v129, %v128
      %v133 = vsel %vm97, %v116, 0
      %135 = vmatprep.subr.bf16.mxu0 0
      %136 = vmatpush1.bf16.msra.mxu0 0
      %137 = vmatprep.subr.bf16.mxu0 0
      %138 = vmatpush1.bf16.msra.mxu0 0
      %139 = vmatprep.subr.bf16.mxu0 0
      %140 = vmatpush1.bf16.msra.mxu0 0
      %141 = vmatprep.subr.bf16.mxu0 0
      %142 = vmatpush1.bf16.msra.mxu0 0
      %143 = vmatprep.subr.bf16.mxu0 0
      %144 = vmatpush1.bf16.msra.mxu0 0
      %145 = vmatprep.subr.bf16.mxu0 0
      %146 = vmatpush1.bf16.msra.mxu0 0
      %147 = vmatprep.subr.bf16.mxu0 0
      %148 = vmatpush1.bf16.msra.mxu0 0
      %149 = vmatprep.subr.bf16.mxu0 0
      %150 = vmatpush1.bf16.msra.mxu0 %v130
      %151 = vmatprep.subr.bf16.mxu0 0
      %152 = vmatpush2.bf16.msra.mxu0 0
      %153 = vmatprep.subr.bf16.mxu0 0
      %154 = vmatpush2.bf16.msra.mxu0 0
      %155 = vmatprep.subr.bf16.mxu0 0
      %156 = vmatpush2.bf16.msra.mxu0 0
      %157 = vmatprep.subr.bf16.mxu0 0
      %158 = vmatpush2.bf16.msra.mxu0 0
      %159 = vmatprep.subr.bf16.mxu0 0
      %160 = vmatpush2.bf16.msra.mxu0 0
      %161 = vmatprep.subr.bf16.mxu0 0
      %162 = vmatpush2.bf16.msra.mxu0 0
      %163 = vmatprep.subr.bf16.mxu0 0
      %164 = vmatpush2.bf16.msra.mxu0 0
      %165 = vmatprep.subr.bf16.mxu0 0
      %166 = vmatpush2.bf16.msra.mxu0 0
      %167 = vmatprep.mubr.bf16.mxu0 0
      %168 = vmatmul.mubr.bf16.gmra.mxu0 %v133
      %v169 = vpop.f32.mrf.mxu0
      %v170 = vadd.f32 %v124, %v169
      %v171 = vpop.f32.mrf.mxu0
      %v172 = vpop.f32.mrf.mxu0
      %v173 = vadd.f32 %v124, %v172
      %v174 = vpop.f32.mrf.mxu0
      %175 = vdwg.mxu0
      %v176 = vpack.c.bf16 %v173, %v170
      %v178 = vunpack.c.l.b16 %v176
      %v179 = vunpack.c.h.b16 %v176
      %v180 = vpack.c.b16 %v178, %v178
      %v181 = vpack.c.b16 %v179, %v179
      %184 = vst [vmem:[#allocation3] sm:$0xf] %v180
      %185 = vst [vmem:[#allocation3 + $0x4] sm:$0xf] %v181
    $region29: #{tpu_custom_call.1} parent=1 // pred_fallthru
      _
    // Predicated region
    $region30: #{tpu_custom_call.1} parent=1 // pred_check
      _
    $region31: #{tpu_custom_call.1} parent=1 // pred_check_branch
      %187 = sbr.rel (0) target = $region33
    $region32: #{tpu_custom_call.1} parent=1 // pred_region
      %s189 = ssub.s32 128, 128
      %190 = vsyncadd [#allocation4], %s189
      %s191 = sshll.u32 [#allocation3], 4
      %s192 = int_to_ptr.vmem [resolvable:$true] %s191
      %197 = dma.vmem_to_hbm [thread:$0]  %s192, 128, %s5, [#allocation4], 64, 64, 4
    $region33: #{tpu_custom_call.1} parent=1 // pred_fallthru
      _
    // Predicated region
    $region34: #{tpu_custom_call.1} parent=1 // pred_check
      _
    $region35: #{tpu_custom_call.1} parent=1 // pred_check_branch
      %199 = sbr.rel (0) target = $region37
    $region36: #{tpu_custom_call.1} parent=1 // pred_region
      %200 = dma.done [#allocation4], 128
    $region37: #{tpu_custom_call.1} parent=1 // pred_fallthru
      _
    %201 = vsyncpa [#allocation4], 1

</llo_original>
